<compile_context>
chip_gen: v7x
topology: tpu7x:2x2x1
jax: 0.10.0
libtpu: 0.0.40
codegen_flags: <defaults>
</compile_context>

<pallas_src>
import jax
import jax.numpy as jnp
from jax.experimental import pallas as pl
from jax.experimental.pallas import tpu as pltpu

NUM_FEATURES = 4
HIDDEN_NODES = 16
NUM_CLASSES = 3

_LANE = 128  # TPU lane width; batch tiles are multiples of this

# Row layout of the packed parameter slab (48 x 16, f32).  Sections start on
# 8-row (sublane-tile) boundaries so in-kernel slices are tile-aligned.
_W1_ROW = 0    # rows 0:4   = W1.T (4, 16)       (rows 4:8 zero)
_B1_ROW = 8    # row  8     = b1   (16,)
_B2_ROW = 9    # row  9     = b2   (16,)
_B3_ROW = 10   # row  10    = b3 padded to 16    (rows 11:16 zero)
_W2_ROW = 16   # rows 16:32 = W2.T (16, 16)
_W3_ROW = 32   # rows 32:48 = W3.T padded to (16, 16) (cols 3: are zero)
_PACK_ROWS = 48


def _round_up(v, m):
    return ((v + m - 1) // m) * m


def iris_mlp_kernel(p_ref, x_ref, o_ref):
    # p_ref: (48, 16) packed parameters (resident in VMEM, DMA'd once).
    # x_ref: (bt, 4) batch tile in natural layout; o_ref: (bt, 3) logits tile.
    x = x_ref[...]                                               # (bt, 4) f32

    w1t = p_ref[_W1_ROW:_W1_ROW + NUM_FEATURES, :]               # (4, 16)
    w2t = p_ref[_W2_ROW:_W2_ROW + HIDDEN_NODES, :]               # (16, 16)
    w3t = p_ref[_W3_ROW:_W3_ROW + HIDDEN_NODES, :]               # (16, 16), cols>=3 zero
    b1 = p_ref[_B1_ROW:_B1_ROW + 1, :]                           # (1, 16)
    b2 = p_ref[_B2_ROW:_B2_ROW + 1, :]                           # (1, 16)
    b3 = p_ref[_B3_ROW:_B3_ROW + 1, :]                           # (1, 16), cols>=3 zero

    h1 = jnp.maximum(jnp.dot(x, w1t, preferred_element_type=jnp.float32) + b1, 0.0)
    h2 = jnp.maximum(jnp.dot(h1, w2t, preferred_element_type=jnp.float32) + b2, 0.0)
    logits16 = jnp.dot(h2, w3t, preferred_element_type=jnp.float32) + b3      # (bt, 16)
    o_ref[...] = logits16[:, :NUM_CLASSES].astype(o_ref.dtype)                # (bt, 3)


def pack_params(params):
    """Pack the six nn.Linear tensors into one (48, 16) f32 slab (done once)."""
    w1, b1, w2, b2, w3, b3 = params  # PyTorch layout: W (out, in), b (out,)
    p = jnp.zeros((_PACK_ROWS, HIDDEN_NODES), jnp.float32)
    p = p.at[_W1_ROW:_W1_ROW + NUM_FEATURES, :].set(w1.T)                 # (4, 16)
    p = p.at[_B1_ROW, :].set(b1)
    p = p.at[_B2_ROW, :].set(b2)
    p = p.at[_B3_ROW, :NUM_CLASSES].set(b3)
    p = p.at[_W2_ROW:_W2_ROW + HIDDEN_NODES, :].set(w2.T)                 # (16, 16)
    p = p.at[_W3_ROW:_W3_ROW + HIDDEN_NODES, :NUM_CLASSES].set(w3.T)      # (16, 3)
    return p


def iris_nn_forward(x, packed_params, *, max_batch_tile=2048):
    """IrisNN forward. x: (B, 4) f32. Returns (B, 3) f32 logits."""
    B, F = x.shape
    assert F == NUM_FEATURES
    assert packed_params.shape == (_PACK_ROWS, HIDDEN_NODES)

    # Batch tile: lane-multiple, large enough to amortize grid-step overhead,
    # capped so large batches still give >= 2 parallel steps (v7x megacore).
    bt = min(max_batch_tile, _round_up(pl.cdiv(B, 2), _LANE))
    grid = (pl.cdiv(B, bt),)  # ragged last tile handled by Pallas masked stores

    return pl.pallas_call(
        iris_mlp_kernel,
        out_shape=jax.ShapeDtypeStruct((B, NUM_CLASSES), jnp.float32),
        grid=grid,
        in_specs=[
            # Packed params: constant block index -> fetched once, stays in VMEM.
            pl.BlockSpec((_PACK_ROWS, HIDDEN_NODES), lambda i: (0, 0)),
            # x: contiguous (bt, 4) row-strips straight from HBM (no wrapper transpose/pad).
            pl.BlockSpec((bt, NUM_FEATURES), lambda i: (i, 0)),
        ],
        out_specs=pl.BlockSpec((bt, NUM_CLASSES), lambda i: (i, 0)),
        compiler_params=pltpu.CompilerParams(
            dimension_semantics=("parallel",),
            vmem_limit_bytes=32 * 1024 * 1024,  # guardrail; ~9 MiB actually used at bt=2048
        ),
    )(packed_params, x)


def init_params(key):
    """Deterministic init mimicking nn.Linear's U(-1/sqrt(fan_in), 1/sqrt(fan_in))."""
    def linear(k, fan_in, fan_out):
        kw, kb = jax.random.split(k)
        bound = 1.0 / jnp.sqrt(fan_in)
        w = jax.random.uniform(kw, (fan_out, fan_in), jnp.float32, -bound, bound)
        b = jax.random.uniform(kb, (fan_out,), jnp.float32, -bound, bound)
        return w, b

    k1, k2, k3 = jax.random.split(key, 3)
    w1, b1 = linear(k1, NUM_FEATURES, HIDDEN_NODES)
    w2, b2 = linear(k2, HIDDEN_NODES, HIDDEN_NODES)
    w3, b3 = linear(k3, HIDDEN_NODES, NUM_CLASSES)
    return (w1, b1, w2, b2, w3, b3)


def reference_forward(x, params):
    # Exact nn.Linear semantics: y = x @ W.T + b
    w1, b1, w2, b2, w3, b3 = params
    h1 = jnp.maximum(x @ w1.T + b1, 0.0)
    h2 = jnp.maximum(h1 @ w2.T + b2, 0.0)
    return h2 @ w3.T + b3


if __name__ == "__main__":
    key = jax.random.PRNGKey(0)
    k_params, k_x1, k_x2, k_x3 = jax.random.split(key, 4)

    params = init_params(k_params)
    packed = jax.block_until_ready(pack_params(params))  # one-time packing

    # Small Iris-like batch (single masked tile: bt=128 > B=8).
    x_small = jax.random.normal(k_x1, (8, NUM_FEATURES), jnp.float32)
    out_small = jax.block_until_ready(iris_nn_forward(x_small, packed))
    assert out_small.shape == (8, NUM_CLASSES)
    assert jnp.allclose(out_small, reference_forward(x_small, params),
                        atol=1e-5, rtol=1e-5), "small-batch mismatch"

    # Ragged multi-tile batch (bt=512, grid=2, last tile masked at row 1000).
    x_ragged = jax.random.normal(k_x2, (1000, NUM_FEATURES), jnp.float32)
    out_ragged = jax.block_until_ready(iris_nn_forward(x_ragged, packed))
    assert out_ragged.shape == (1000, NUM_CLASSES)
    assert jnp.allclose(out_ragged, reference_forward(x_ragged, params),
                        atol=1e-5, rtol=1e-5), "ragged-batch mismatch"

    # Larger exact multi-tile batch (bt=1024, 2 parallel grid steps).
    x_big = jax.random.normal(k_x3, (2048, NUM_FEATURES), jnp.float32)
    out_big = jax.block_until_ready(iris_nn_forward(x_big, packed))
    assert out_big.shape == (2048, NUM_CLASSES)
    assert jnp.allclose(out_big, reference_forward(x_big, params),
                        atol=1e-5, rtol=1e-5), "large-batch mismatch"

    print("KERNEL_OK")
</pallas_src>

<mosaic_0001>
module attributes {stable_mosaic.version = 11 : i64} {
  func.func @iris_mlp_kernel(%arg0: i32, %arg1: memref<48x16xf32, #tpu.memory_space<vmem>>, %arg2: memref<128x4xf32, #tpu.memory_space<vmem>>, %arg3: memref<128x3xf32, #tpu.memory_space<vmem>>) attributes {dimension_semantics = [#tpu.dimension_semantics<parallel>], iteration_bounds = array<i64: 1>, scalar_prefetch = 0 : i64, scratch_operands = 0 : i64, tpu.core_type = #tpu.core_type<tc>, window_params = [{pipeline_mode = #tpu.pipeline_mode<synchronous>, transform_indices = @transform_0, window_bounds = array<i64: 48, 16>}, {transform_indices = @transform_1, window_bounds = array<i64: 128, 4>}, {transform_indices = @transform_2, window_bounds = array<i64: 128, 3>}]} {
    %c0 = arith.constant 0 : index
    %c0_0 = arith.constant 0 : index
    %0 = vector.load %arg2[%c0, %c0_0] : memref<128x4xf32, #tpu.memory_space<vmem>>, vector<128x4xf32>
    %c0_1 = arith.constant 0 : index
    %c0_2 = arith.constant 0 : index
    %1 = vector.load %arg1[%c0_1, %c0_2] : memref<48x16xf32, #tpu.memory_space<vmem>>, vector<4x16xf32>
    %c16 = arith.constant 16 : index
    %c0_3 = arith.constant 0 : index
    %2 = vector.load %arg1[%c16, %c0_3] : memref<48x16xf32, #tpu.memory_space<vmem>>, vector<16x16xf32>
    %c32 = arith.constant 32 : index
    %c0_4 = arith.constant 0 : index
    %3 = vector.load %arg1[%c32, %c0_4] : memref<48x16xf32, #tpu.memory_space<vmem>>, vector<16x16xf32>
    %c8 = arith.constant 8 : index
    %c0_5 = arith.constant 0 : index
    %4 = vector.load %arg1[%c8, %c0_5] : memref<48x16xf32, #tpu.memory_space<vmem>>, vector<1x16xf32>
    %c9 = arith.constant 9 : index
    %c0_6 = arith.constant 0 : index
    %5 = vector.load %arg1[%c9, %c0_6] : memref<48x16xf32, #tpu.memory_space<vmem>>, vector<1x16xf32>
    %c10 = arith.constant 10 : index
    %c0_7 = arith.constant 0 : index
    %6 = vector.load %arg1[%c10, %c0_7] : memref<48x16xf32, #tpu.memory_space<vmem>>, vector<1x16xf32>
    %cst = arith.constant dense<0.000000e+00> : vector<128x16xf32>
    %7 = tpu.matmul %0, %1, %cst {dimension_numbers = #tpu.dot_dimension_numbers<[1], [0], [0], [1], [0, 0, 1, 1], [], []>} : vector<128x4xf32>, vector<4x16xf32>, vector<128x16xf32> -> vector<128x16xf32>
    %8 = vector.broadcast %4 : vector<1x16xf32> to vector<128x16xf32>
    %9 = arith.addf %7, %8 : vector<128x16xf32>
    %cst_8 = arith.constant 0.000000e+00 : f32
    %10 = vector.broadcast %cst_8 : f32 to vector<128x16xf32>
    %11 = arith.maximumf %9, %10 : vector<128x16xf32>
    %cst_9 = arith.constant dense<0.000000e+00> : vector<128x16xf32>
    %12 = tpu.matmul %11, %2, %cst_9 {dimension_numbers = #tpu.dot_dimension_numbers<[1], [0], [0], [1], [0, 0, 1, 1], [], []>} : vector<128x16xf32>, vector<16x16xf32>, vector<128x16xf32> -> vector<128x16xf32>
    %13 = vector.broadcast %5 : vector<1x16xf32> to vector<128x16xf32>
    %14 = arith.addf %12, %13 : vector<128x16xf32>
    %cst_10 = arith.constant 0.000000e+00 : f32
    %15 = vector.broadcast %cst_10 : f32 to vector<128x16xf32>
    %16 = arith.maximumf %14, %15 : vector<128x16xf32>
    %cst_11 = arith.constant dense<0.000000e+00> : vector<128x16xf32>
    %17 = tpu.matmul %16, %3, %cst_11 {dimension_numbers = #tpu.dot_dimension_numbers<[1], [0], [0], [1], [0, 0, 1, 1], [], []>} : vector<128x16xf32>, vector<16x16xf32>, vector<128x16xf32> -> vector<128x16xf32>
    %18 = vector.broadcast %6 : vector<1x16xf32> to vector<128x16xf32>
    %19 = arith.addf %17, %18 : vector<128x16xf32>
    %20 = vector.extract_strided_slice %19 {offsets = [0, 0], sizes = [128, 3], strides = [1, 1]} : vector<128x16xf32> to vector<128x3xf32>
    %c0_12 = arith.constant 0 : index
    %c0_13 = arith.constant 0 : index
    %21 = vector.load %arg3[%c0_12, %c0_13] : memref<128x3xf32, #tpu.memory_space<vmem>>, vector<128x3xf32>
    tpu.vector_store %arg3[%c0_12, %c0_13], %20 {strides = array<i32>} : memref<128x3xf32, #tpu.memory_space<vmem>>, vector<128x3xf32>,
    return
  }
  func.func @transform_0(%arg0: i32) -> (i32, i32) {
    %c0_i32 = arith.constant 0 : i32
    %c0_i32_0 = arith.constant 0 : i32
    %c0_i32_1 = arith.constant 0 : i32
    return %c0_i32, %c0_i32_0 : i32, i32
  }
  func.func @transform_1(%arg0: i32) -> (i32, i32) {
    %c0_i32 = arith.constant 0 : i32
    %c0_i32_0 = arith.constant 0 : i32
    return %arg0, %c0_i32 : i32, i32
  }
  func.func @transform_2(%arg0: i32) -> (i32, i32) {
    %c0_i32 = arith.constant 0 : i32
    %c0_i32_0 = arith.constant 0 : i32
    return %arg0, %c0_i32 : i32, i32
  }
}

</mosaic_0001>

<llo_original>
// kernel: tpu_custom_call.1
$region0: #{tpu_custom_call.1}
  #allocation0 [shape = 'u32[]', space=smem, size = 0x4, offset = 0x4, fixed_abs, tag = 'smem constant byte address 0x4 - core index']
  #allocation1 [shape = 'u32[144,128]{1,0:T(1,128)}', space=vmem, size = 0x12000, scoped, tag = 'internal scratch']
  %s0 = inlined_call_operand.vmem [shape: f32[48,16], index: 0, kind: input, shape index: {}]
  %s1 = inlined_call_operand.vmem [shape: f32[8,4], index: 1, kind: input, shape index: {}]
  %s2 = inlined_call_operand.vmem [shape: f32[8,3], index: 2, kind: output, shape index: {}]
  %s3 = sld [smem:[#allocation0]]
  $region52: #{tpu_custom_call.1} parent=0
    _
  %s5 = ssub.s32 1, %s3
  %s6 = scalar_select 0, %s5, %s3
  $region1: #{tpu_custom_call.1} parent=0
    #allocation2 [shape = 'u8[65536]{0}', space=vmem, size = 0x10000, scoped, tag = 'output window, operand 0, single buffered']
    // Predicated region
    $region2: #{tpu_custom_call.1} parent=1 // pred_check
      _
    $region3: #{tpu_custom_call.1} parent=1 // pred_check_branch
      %8 = sbr.rel (0) target = $region5
    $region4: #{tpu_custom_call.1} parent=1 // pred_region
      _
    $region5: #{tpu_custom_call.1} parent=1 // pred_fallthru
      _
    // Predicated region
    $region6: #{tpu_custom_call.1} parent=1 // pred_check
      _
    $region7: #{tpu_custom_call.1} parent=1 // pred_check_branch
      %10 = sbr.rel (0) target = $region9
    $region8: #{tpu_custom_call.1} parent=1 // pred_region
      _
    $region9: #{tpu_custom_call.1} parent=1 // pred_fallthru
      _
    %v11 = vld [vmem:[%s1] sm:$0xff]
    %v12 = vld [vmem:[%s1 + $0x8] sm:$0xff]
    %v13 = vld [vmem:[%s1 + $0x10] sm:$0xff]
    %v14 = vld [vmem:[%s1 + $0x18] sm:$0xff]
    %v15 = vld [vmem:[%s1 + $0x20] sm:$0xff]
    %v16 = vld [vmem:[%s1 + $0x28] sm:$0xff]
    %v17 = vld [vmem:[%s1 + $0x30] sm:$0xff]
    %v18 = vld [vmem:[%s1 + $0x38] sm:$0xff]
    %v19 = vld [vmem:[%s1 + $0x40] sm:$0xff]
    %v20 = vld [vmem:[%s1 + $0x48] sm:$0xff]
    %v21 = vld [vmem:[%s1 + $0x50] sm:$0xff]
    %v22 = vld [vmem:[%s1 + $0x58] sm:$0xff]
    %v23 = vld [vmem:[%s1 + $0x60] sm:$0xff]
    %v24 = vld [vmem:[%s1 + $0x68] sm:$0xff]
    %v25 = vld [vmem:[%s1 + $0x70] sm:$0xff]
    %v26 = vld [vmem:[%s1 + $0x78] sm:$0xff]
    %v27 = vld [vmem:[%s0] sm:$0xf]
    %v28 = vld [vmem:[%s0 + $0x10] sm:$0xff]
    %v29 = vld [vmem:[%s0 + $0x18] sm:$0xff]
    %v30 = vld [vmem:[%s0 + $0x20] sm:$0xff]
    %v31 = vld [vmem:[%s0 + $0x28] sm:$0xff]
    %v32 = vld [vmem:[%s0 + $0x8] sm:$0x1]
    %v33 = vld [vmem:[%s0 + $0x9] sm:$0x1]
    %v34 = vld [vmem:[%s0 + $0xa] sm:$0x1]
    %v35 = vlaneseq
    %v36 = vshrl.u32 %v35, 7
    %v37 = vsub.s32 0, %v36
    %v38 = vrot.slane %v32, %v37
    %vm39 = vcmask 31744
    %v41 = vsel %vm39, %v11, 0
    %v44 = vsel %vm39, %v12, 0
    %v47 = vsel %vm39, %v13, 0
    %v50 = vsel %vm39, %v14, 0
    %v53 = vsel %vm39, %v15, 0
    %v56 = vsel %vm39, %v16, 0
    %v59 = vsel %vm39, %v17, 0
    %v62 = vsel %vm39, %v18, 0
    %v65 = vsel %vm39, %v19, 0
    %v68 = vsel %vm39, %v20, 0
    %v71 = vsel %vm39, %v21, 0
    %v74 = vsel %vm39, %v22, 0
    %v77 = vsel %vm39, %v23, 0
    %v80 = vsel %vm39, %v24, 0
    %v83 = vsel %vm39, %v25, 0
    %v86 = vsel %vm39, %v26, 0
    %vm88 = vcmask 1043456
    %v90 = vsel %vm88, %v27, 0
    %92 = vmatprep.subr.mxu0 0.0
    %93 = vmatpush1.msra.mxu0 %v90
    %94 = vmatprep.subr.mxu0 0.0
    %95 = vmatpush1.msra.mxu0 0.0
    %96 = vmatprep.subr.mxu0 0.0
    %97 = vmatpush1.msra.mxu0 0.0
    %98 = vmatprep.subr.mxu0 0.0
    %99 = vmatpush1.msra.mxu0 0.0
    %100 = vmatprep.subr.mxu0 0.0
    %101 = vmatpush1.msra.mxu0 0.0
    %102 = vmatprep.subr.mxu0 0.0
    %103 = vmatpush1.msra.mxu0 0.0
    %104 = vmatprep.subr.mxu0 0.0
    %105 = vmatpush1.msra.mxu0 0.0
    %106 = vmatprep.subr.mxu0 0.0
    %107 = vmatpush1.msra.mxu0 0.0
    %108 = vmatprep.subr.mxu0 0.0
    %109 = vmatpush1.msra.mxu0 0.0
    %110 = vmatprep.subr.mxu0 0.0
    %111 = vmatpush1.msra.mxu0 0.0
    %112 = vmatprep.subr.mxu0 0.0
    %113 = vmatpush1.msra.mxu0 0.0
    %114 = vmatprep.subr.mxu0 0.0
    %115 = vmatpush1.msra.mxu0 0.0
    %116 = vmatprep.subr.mxu0 0.0
    %117 = vmatpush1.msra.mxu0 0.0
    %118 = vmatprep.subr.mxu0 0.0
    %119 = vmatpush1.msra.mxu0 0.0
    %120 = vmatprep.subr.mxu0 0.0
    %121 = vmatpush1.msra.mxu0 0.0
    %122 = vmatprep.subr.mxu0 0.0
    %123 = vmatpush1.msra.mxu0 0.0
    %124 = vmatprep.subr.mxu0 0.0
    %125 = vmatpush1.msra.mxu0 0.0
    %126 = vmatprep.subr.mxu0 0.0
    %127 = vmatpush1.msra.mxu0 0.0
    %128 = vmatprep.subr.mxu0 0.0
    %129 = vmatpush1.msra.mxu0 0.0
    %130 = vmatprep.subr.mxu0 0.0
    %131 = vmatpush1.msra.mxu0 0.0
    %132 = vmatprep.subr.mxu0 0.0
    %133 = vmatpush1.msra.mxu0 0.0
    %134 = vmatprep.subr.mxu0 0.0
    %135 = vmatpush1.msra.mxu0 0.0
    %136 = vmatprep.subr.mxu0 0.0
    %137 = vmatpush1.msra.mxu0 0.0
    %138 = vmatprep.subr.mxu0 0.0
    %139 = vmatpush1.msra.mxu0 0.0
    %140 = vmatprep.subr.mxu0 0.0
    %141 = vmatpush1.msra.mxu0 0.0
    %142 = vmatprep.subr.mxu0 0.0
    %143 = vmatpush1.msra.mxu0 0.0
    %144 = vmatprep.subr.mxu0 0.0
    %145 = vmatpush1.msra.mxu0 0.0
    %146 = vmatprep.subr.mxu0 0.0
    %147 = vmatpush1.msra.mxu0 0.0
    %148 = vmatprep.subr.mxu0 0.0
    %149 = vmatpush1.msra.mxu0 0.0
    %150 = vmatprep.subr.mxu0 0.0
    %151 = vmatpush1.msra.mxu0 0.0
    %152 = vmatprep.subr.mxu0 0.0
    %153 = vmatpush1.msra.mxu0 0.0
    %154 = vmatprep.subr.mxu0 0.0
    %155 = vmatpush1.msra.mxu0 0.0
    %156 = vmatprep.mubr.f32.mxu0 0.0
    %157 = vmatmul.mubr.f32.gmra.mrb[0].mxu0 %v41
    %v158 = vpop.f32.mrb[0].mxu0
    %v159 = vadd.f32 %v38, %v158
    %v160 = vpop.f32.mrb[0].mxu0
    %161 = vmatprep.mubr.f32.mxu0 0.0
    %162 = vmatmul.mubr.f32.gmra.mrb[0].mxu0 %v44
    %v163 = vpop.f32.mrb[0].mxu0
    %v164 = vadd.f32 %v38, %v163
    %v165 = vpop.f32.mrb[0].mxu0
    %166 = vmatprep.mubr.f32.mxu0 0.0
    %167 = vmatmul.mubr.f32.gmra.mrb[0].mxu0 %v47
    %v168 = vpop.f32.mrb[0].mxu0
    %v169 = vadd.f32 %v38, %v168
    %v170 = vpop.f32.mrb[0].mxu0
    %171 = vmatprep.mubr.f32.mxu0 0.0
    %172 = vmatmul.mubr.f32.gmra.mrb[0].mxu0 %v50
    %v173 = vpop.f32.mrb[0].mxu0
    %v174 = vadd.f32 %v38, %v173
    %v175 = vpop.f32.mrb[0].mxu0
    %176 = vmatprep.mubr.f32.mxu0 0.0
    %177 = vmatmul.mubr.f32.gmra.mrb[0].mxu0 %v53
    %v178 = vpop.f32.mrb[0].mxu0
    %v179 = vadd.f32 %v38, %v178
    %v180 = vpop.f32.mrb[0].mxu0
    %181 = vmatprep.mubr.f32.mxu0 0.0
    %182 = vmatmul.mubr.f32.gmra.mrb[0].mxu0 %v56
    %v183 = vpop.f32.mrb[0].mxu0
    %v184 = vadd.f32 %v38, %v183
    %v185 = vpop.f32.mrb[0].mxu0
    %186 = vmatprep.mubr.f32.mxu0 0.0
    %187 = vmatmul.mubr.f32.gmra.mrb[0].mxu0 %v59
    %v188 = vpop.f32.mrb[0].mxu0
    %v189 = vadd.f32 %v38, %v188
    %v190 = vpop.f32.mrb[0].mxu0
    %191 = vmatprep.mubr.f32.mxu0 0.0
    %192 = vmatmul.mubr.f32.gmra.mrb[0].mxu0 %v62
    %v193 = vpop.f32.mrb[0].mxu0
    %v194 = vadd.f32 %v38, %v193
    %v195 = vpop.f32.mrb[0].mxu0
    %196 = vmatprep.mubr.f32.mxu0 0.0
    %197 = vmatmul.mubr.f32.gmra.mrb[0].mxu0 %v65
    %v198 = vpop.f32.mrb[0].mxu0
    %v199 = vadd.f32 %v38, %v198
    %v200 = vpop.f32.mrb[0].mxu0
    %201 = vmatprep.mubr.f32.mxu0 0.0
    %202 = vmatmul.mubr.f32.gmra.mrb[0].mxu0 %v68
    %v203 = vpop.f32.mrb[0].mxu0
    %v204 = vadd.f32 %v38, %v203
    %v205 = vpop.f32.mrb[0].mxu0
    %206 = vmatprep.mubr.f32.mxu0 0.0
    %207 = vmatmul.mubr.f32.gmra.mrb[0].mxu0 %v71
    %v208 = vpop.f32.mrb[0].mxu0
    %v209 = vadd.f32 %v38, %v208
    %v210 = vpop.f32.mrb[0].mxu0
    %211 = vmatprep.mubr.f32.mxu0 0.0
    %212 = vmatmul.mubr.f32.gmra.mrb[0].mxu0 %v74
    %v213 = vpop.f32.mrb[0].mxu0
    %v214 = vadd.f32 %v38, %v213
    %v215 = vpop.f32.mrb[0].mxu0
    %216 = vmatprep.mubr.f32.mxu0 0.0
    %217 = vmatmul.mubr.f32.gmra.mrb[0].mxu0 %v77
    %v218 = vpop.f32.mrb[0].mxu0
    %v219 = vadd.f32 %v38, %v218
    %v220 = vpop.f32.mrb[0].mxu0
    %221 = vmatprep.mubr.f32.mxu0 0.0
    %222 = vmatmul.mubr.f32.gmra.mrb[0].mxu0 %v80
    %v223 = vpop.f32.mrb[0].mxu0
    %v224 = vadd.f32 %v38, %v223
    %v225 = vpop.f32.mrb[0].mxu0
    %226 = vmatprep.mubr.f32.mxu0 0.0
    %227 = vmatmul.mubr.f32.gmra.mrb[0].mxu0 %v83
    %v228 = vpop.f32.mrb[0].mxu0
    %v229 = vadd.f32 %v38, %v228
    %v230 = vpop.f32.mrb[0].mxu0
    %231 = vmatprep.mubr.f32.mxu0 0.0
    %232 = vmatmul.mubr.f32.gmra.mrb[0].mxu0 %v86
    %v233 = vpop.f32.mrb[0].mxu0
    %v234 = vadd.f32 %v38, %v233
    %v235 = vpop.f32.mrb[0].mxu0
    %236 = vdwg.mxu0
    %v237 = vmax.f32 %v159, 0.0
    %v238 = vmax.f32 %v164, 0.0
    %v239 = vmax.f32 %v169, 0.0
    %v240 = vmax.f32 %v174, 0.0
    %v241 = vmax.f32 %v179, 0.0
    %v242 = vmax.f32 %v184, 0.0
    %v243 = vmax.f32 %v189, 0.0
    %v244 = vmax.f32 %v194, 0.0
    %v245 = vmax.f32 %v199, 0.0
    %v246 = vmax.f32 %v204, 0.0
    %v247 = vmax.f32 %v209, 0.0
    %v248 = vmax.f32 %v214, 0.0
    %v249 = vmax.f32 %v219, 0.0
    %v250 = vmax.f32 %v224, 0.0
    %v251 = vmax.f32 %v229, 0.0
    %v252 = vmax.f32 %v234, 0.0
    %v253 = vlaneseq
    %v254 = vshrl.u32 %v253, 7
    %v255 = vsub.s32 0, %v254
    %v256 = vrot.slane %v33, %v255
    %vm257 = vcmask 130048
    %v259 = vsel %vm257, %v237, 0
    %v262 = vsel %vm257, %v238, 0
    %v265 = vsel %vm257, %v239, 0
    %v268 = vsel %vm257, %v240, 0
    %v271 = vsel %vm257, %v241, 0
    %v274 = vsel %vm257, %v242, 0
    %v277 = vsel %vm257, %v243, 0
    %v280 = vsel %vm257, %v244, 0
    %v283 = vsel %vm257, %v245, 0
    %v286 = vsel %vm257, %v246, 0
    %v289 = vsel %vm257, %v247, 0
    %v292 = vsel %vm257, %v248, 0
    %v295 = vsel %vm257, %v249, 0
    %v298 = vsel %vm257, %v250, 0
    %v301 = vsel %vm257, %v251, 0
    %v304 = vsel %vm257, %v252, 0
    %306 = vmatprep.subr.mxu0 0.0
    %307 = vmatpush1.msra.mxu0 %v28
    %308 = vmatprep.subr.mxu0 0.0
    %309 = vmatpush1.msra.mxu0 %v29
    %310 = vmatprep.subr.mxu0 0.0
    %311 = vmatpush1.msra.mxu0 0.0
    %312 = vmatprep.subr.mxu0 0.0
    %313 = vmatpush1.msra.mxu0 0.0
    %314 = vmatprep.subr.mxu0 0.0
    %315 = vmatpush1.msra.mxu0 0.0
    %316 = vmatprep.subr.mxu0 0.0
    %317 = vmatpush1.msra.mxu0 0.0
    %318 = vmatprep.subr.mxu0 0.0
    %319 = vmatpush1.msra.mxu0 0.0
    %320 = vmatprep.subr.mxu0 0.0
    %321 = vmatpush1.msra.mxu0 0.0
    %322 = vmatprep.subr.mxu0 0.0
    %323 = vmatpush1.msra.mxu0 0.0
    %324 = vmatprep.subr.mxu0 0.0
    %325 = vmatpush1.msra.mxu0 0.0
    %326 = vmatprep.subr.mxu0 0.0
    %327 = vmatpush1.msra.mxu0 0.0
    %328 = vmatprep.subr.mxu0 0.0
    %329 = vmatpush1.msra.mxu0 0.0
    %330 = vmatprep.subr.mxu0 0.0
    %331 = vmatpush1.msra.mxu0 0.0
    %332 = vmatprep.subr.mxu0 0.0
    %333 = vmatpush1.msra.mxu0 0.0
    %334 = vmatprep.subr.mxu0 0.0
    %335 = vmatpush1.msra.mxu0 0.0
    %336 = vmatprep.subr.mxu0 0.0
    %337 = vmatpush1.msra.mxu0 0.0
    %338 = vmatprep.subr.mxu0 0.0
    %339 = vmatpush1.msra.mxu0 0.0
    %340 = vmatprep.subr.mxu0 0.0
    %341 = vmatpush1.msra.mxu0 0.0
    %342 = vmatprep.subr.mxu0 0.0
    %343 = vmatpush1.msra.mxu0 0.0
    %344 = vmatprep.subr.mxu0 0.0
    %345 = vmatpush1.msra.mxu0 0.0
    %346 = vmatprep.subr.mxu0 0.0
    %347 = vmatpush1.msra.mxu0 0.0
    %348 = vmatprep.subr.mxu0 0.0
    %349 = vmatpush1.msra.mxu0 0.0
    %350 = vmatprep.subr.mxu0 0.0
    %351 = vmatpush1.msra.mxu0 0.0
    %352 = vmatprep.subr.mxu0 0.0
    %353 = vmatpush1.msra.mxu0 0.0
    %354 = vmatprep.subr.mxu0 0.0
    %355 = vmatpush1.msra.mxu0 0.0
    %356 = vmatprep.subr.mxu0 0.0
    %357 = vmatpush1.msra.mxu0 0.0
    %358 = vmatprep.subr.mxu0 0.0
    %359 = vmatpush1.msra.mxu0 0.0
    %360 = vmatprep.subr.mxu0 0.0
    %361 = vmatpush1.msra.mxu0 0.0
    %362 = vmatprep.subr.mxu0 0.0
    %363 = vmatpush1.msra.mxu0 0.0
    %364 = vmatprep.subr.mxu0 0.0
    %365 = vmatpush1.msra.mxu0 0.0
    %366 = vmatprep.subr.mxu0 0.0
    %367 = vmatpush1.msra.mxu0 0.0
    %368 = vmatprep.subr.mxu0 0.0
    %369 = vmatpush1.msra.mxu0 0.0
    %370 = vmatprep.mubr.f32.mxu0 0.0
    %371 = vmatmul.mubr.f32.gmra.mrb[0].mxu0 %v259
    %v372 = vpop.f32.mrb[0].mxu0
    %v373 = vadd.f32 %v256, %v372
    %v374 = vpop.f32.mrb[0].mxu0
    %375 = vmatprep.mubr.f32.mxu0 0.0
    %376 = vmatmul.mubr.f32.gmra.mrb[0].mxu0 %v262
    %v377 = vpop.f32.mrb[0].mxu0
    %v378 = vadd.f32 %v256, %v377
    %v379 = vpop.f32.mrb[0].mxu0
    %380 = vmatprep.mubr.f32.mxu0 0.0
    %381 = vmatmul.mubr.f32.gmra.mrb[0].mxu0 %v265
    %v382 = vpop.f32.mrb[0].mxu0
    %v383 = vadd.f32 %v256, %v382
    %v384 = vpop.f32.mrb[0].mxu0
    %385 = vmatprep.mubr.f32.mxu0 0.0
    %386 = vmatmul.mubr.f32.gmra.mrb[0].mxu0 %v268
    %v387 = vpop.f32.mrb[0].mxu0
    %v388 = vadd.f32 %v256, %v387
    %v389 = vpop.f32.mrb[0].mxu0
    %390 = vmatprep.mubr.f32.mxu0 0.0
    %391 = vmatmul.mubr.f32.gmra.mrb[0].mxu0 %v271
    %v392 = vpop.f32.mrb[0].mxu0
    %v393 = vadd.f32 %v256, %v392
    %v394 = vpop.f32.mrb[0].mxu0
    %395 = vmatprep.mubr.f32.mxu0 0.0
    %396 = vmatmul.mubr.f32.gmra.mrb[0].mxu0 %v274
    %v397 = vpop.f32.mrb[0].mxu0
    %v398 = vadd.f32 %v256, %v397
    %v399 = vpop.f32.mrb[0].mxu0
    %400 = vmatprep.mubr.f32.mxu0 0.0
    %401 = vmatmul.mubr.f32.gmra.mrb[0].mxu0 %v277
    %v402 = vpop.f32.mrb[0].mxu0
    %v403 = vadd.f32 %v256, %v402
    %v404 = vpop.f32.mrb[0].mxu0
    %405 = vmatprep.mubr.f32.mxu0 0.0
    %406 = vmatmul.mubr.f32.gmra.mrb[0].mxu0 %v280
    %v407 = vpop.f32.mrb[0].mxu0
    %v408 = vadd.f32 %v256, %v407
    %v409 = vpop.f32.mrb[0].mxu0
    %410 = vmatprep.mubr.f32.mxu0 0.0
    %411 = vmatmul.mubr.f32.gmra.mrb[0].mxu0 %v283
    %v412 = vpop.f32.mrb[0].mxu0
    %v413 = vadd.f32 %v256, %v412
    %v414 = vpop.f32.mrb[0].mxu0
    %415 = vmatprep.mubr.f32.mxu0 0.0
    %416 = vmatmul.mubr.f32.gmra.mrb[0].mxu0 %v286
    %v417 = vpop.f32.mrb[0].mxu0
    %v418 = vadd.f32 %v256, %v417
    %v419 = vpop.f32.mrb[0].mxu0
    %420 = vmatprep.mubr.f32.mxu0 0.0
    %421 = vmatmul.mubr.f32.gmra.mrb[0].mxu0 %v289
    %v422 = vpop.f32.mrb[0].mxu0
    %v423 = vadd.f32 %v256, %v422
    %v424 = vpop.f32.mrb[0].mxu0
    %425 = vmatprep.mubr.f32.mxu0 0.0
    %426 = vmatmul.mubr.f32.gmra.mrb[0].mxu0 %v292
    %v427 = vpop.f32.mrb[0].mxu0
    %v428 = vadd.f32 %v256, %v427
    %v429 = vpop.f32.mrb[0].mxu0
    %430 = vmatprep.mubr.f32.mxu0 0.0
    %431 = vmatmul.mubr.f32.gmra.mrb[0].mxu0 %v295
    %v432 = vpop.f32.mrb[0].mxu0
    %v433 = vadd.f32 %v256, %v432
    %v434 = vpop.f32.mrb[0].mxu0
    %435 = vmatprep.mubr.f32.mxu0 0.0
    %436 = vmatmul.mubr.f32.gmra.mrb[0].mxu0 %v298
    %v437 = vpop.f32.mrb[0].mxu0
    %v438 = vadd.f32 %v256, %v437
    %v439 = vpop.f32.mrb[0].mxu0
    %440 = vmatprep.mubr.f32.mxu0 0.0
    %441 = vmatmul.mubr.f32.gmra.mrb[0].mxu0 %v301
    %v442 = vpop.f32.mrb[0].mxu0
    %v443 = vadd.f32 %v256, %v442
    %v444 = vpop.f32.mrb[0].mxu0
    %445 = vmatprep.mubr.f32.mxu0 0.0
    %446 = vmatmul.mubr.f32.gmra.mrb[0].mxu0 %v304
    %v447 = vpop.f32.mrb[0].mxu0
    %v448 = vadd.f32 %v256, %v447
    %v449 = vpop.f32.mrb[0].mxu0
    %450 = vdwg.mxu0
    %v451 = vmax.f32 %v373, 0.0
    %v452 = vmax.f32 %v378, 0.0
    %v453 = vmax.f32 %v383, 0.0
    %v454 = vmax.f32 %v388, 0.0
    %v455 = vmax.f32 %v393, 0.0
    %v456 = vmax.f32 %v398, 0.0
    %v457 = vmax.f32 %v403, 0.0
    %v458 = vmax.f32 %v408, 0.0
    %v459 = vmax.f32 %v413, 0.0
    %v460 = vmax.f32 %v418, 0.0
    %v461 = vmax.f32 %v423, 0.0
    %v462 = vmax.f32 %v428, 0.0
    %v463 = vmax.f32 %v433, 0.0
    %v464 = vmax.f32 %v438, 0.0
    %v465 = vmax.f32 %v443, 0.0
    %v466 = vmax.f32 %v448, 0.0
    %v467 = vlaneseq
    %v468 = vshrl.u32 %v467, 7
    %v469 = vsub.s32 0, %v468
    %v470 = vrot.slane %v34, %v469
    %v472 = vsel %vm257, %v451, 0
    %v475 = vsel %vm257, %v452, 0
    %v478 = vsel %vm257, %v453, 0
    %v481 = vsel %vm257, %v454, 0
    %v484 = vsel %vm257, %v455, 0
    %v487 = vsel %vm257, %v456, 0
    %v490 = vsel %vm257, %v457, 0
    %v493 = vsel %vm257, %v458, 0
    %v496 = vsel %vm257, %v459, 0
    %v499 = vsel %vm257, %v460, 0
    %v502 = vsel %vm257, %v461, 0
    %v505 = vsel %vm257, %v462, 0
    %v508 = vsel %vm257, %v463, 0
    %v511 = vsel %vm257, %v464, 0
    %v514 = vsel %vm257, %v465, 0
    %v517 = vsel %vm257, %v466, 0
    %519 = vmatprep.subr.mxu0 0.0
    %520 = vmatpush1.msra.mxu0 %v30
    %521 = vmatprep.subr.mxu0 0.0
    %522 = vmatpush1.msra.mxu0 %v31
    %523 = vmatprep.subr.mxu0 0.0
    %524 = vmatpush1.msra.mxu0 0.0
    %525 = vmatprep.subr.mxu0 0.0
    %526 = vmatpush1.msra.mxu0 0.0
    %527 = vmatprep.subr.mxu0 0.0
    %528 = vmatpush1.msra.mxu0 0.0
    %529 = vmatprep.subr.mxu0 0.0
    %530 = vmatpush1.msra.mxu0 0.0
    %531 = vmatprep.subr.mxu0 0.0
    %532 = vmatpush1.msra.mxu0 0.0
    %533 = vmatprep.subr.mxu0 0.0
    %534 = vmatpush1.msra.mxu0 0.0
    %535 = vmatprep.subr.mxu0 0.0
    %536 = vmatpush1.msra.mxu0 0.0
    %537 = vmatprep.subr.mxu0 0.0
    %538 = vmatpush1.msra.mxu0 0.0
    %539 = vmatprep.subr.mxu0 0.0
    %540 = vmatpush1.msra.mxu0 0.0
    %541 = vmatprep.subr.mxu0 0.0
    %542 = vmatpush1.msra.mxu0 0.0
    %543 = vmatprep.subr.mxu0 0.0
    %544 = vmatpush1.msra.mxu0 0.0
    %545 = vmatprep.subr.mxu0 0.0
    %546 = vmatpush1.msra.mxu0 0.0
    %547 = vmatprep.subr.mxu0 0.0
    %548 = vmatpush1.msra.mxu0 0.0
    %549 = vmatprep.subr.mxu0 0.0
    %550 = vmatpush1.msra.mxu0 0.0
    %551 = vmatprep.subr.mxu0 0.0
    %552 = vmatpush1.msra.mxu0 0.0
    %553 = vmatprep.subr.mxu0 0.0
    %554 = vmatpush1.msra.mxu0 0.0
    %555 = vmatprep.subr.mxu0 0.0
    %556 = vmatpush1.msra.mxu0 0.0
    %557 = vmatprep.subr.mxu0 0.0
    %558 = vmatpush1.msra.mxu0 0.0
    %559 = vmatprep.subr.mxu0 0.0
    %560 = vmatpush1.msra.mxu0 0.0
    %561 = vmatprep.subr.mxu0 0.0
    %562 = vmatpush1.msra.mxu0 0.0
    %563 = vmatprep.subr.mxu0 0.0
    %564 = vmatpush1.msra.mxu0 0.0
    %565 = vmatprep.subr.mxu0 0.0
    %566 = vmatpush1.msra.mxu0 0.0
    %567 = vmatprep.subr.mxu0 0.0
    %568 = vmatpush1.msra.mxu0 0.0
    %569 = vmatprep.subr.mxu0 0.0
    %570 = vmatpush1.msra.mxu0 0.0
    %571 = vmatprep.subr.mxu0 0.0
    %572 = vmatpush1.msra.mxu0 0.0
    %573 = vmatprep.subr.mxu0 0.0
    %574 = vmatpush1.msra.mxu0 0.0
    %575 = vmatprep.subr.mxu0 0.0
    %576 = vmatpush1.msra.mxu0 0.0
    %577 = vmatprep.subr.mxu0 0.0
    %578 = vmatpush1.msra.mxu0 0.0
    %579 = vmatprep.subr.mxu0 0.0
    %580 = vmatpush1.msra.mxu0 0.0
    %581 = vmatprep.subr.mxu0 0.0
    %582 = vmatpush1.msra.mxu0 0.0
    %583 = vmatprep.mubr.f32.mxu0 0.0
    %584 = vmatmul.mubr.f32.gmra.mrb[0].mxu0 %v472
    %v585 = vpop.f32.mrb[0].mxu0
    %v586 = vadd.f32 %v470, %v585
    %v587 = vpop.f32.mrb[0].mxu0
    %588 = vmatprep.mubr.f32.mxu0 0.0
    %589 = vmatmul.mubr.f32.gmra.mrb[0].mxu0 %v475
    %v590 = vpop.f32.mrb[0].mxu0
    %v591 = vadd.f32 %v470, %v590
    %v592 = vpop.f32.mrb[0].mxu0
    %593 = vmatprep.mubr.f32.mxu0 0.0
    %594 = vmatmul.mubr.f32.gmra.mrb[0].mxu0 %v478
    %v595 = vpop.f32.mrb[0].mxu0
    %v596 = vadd.f32 %v470, %v595
    %v597 = vpop.f32.mrb[0].mxu0
    %598 = vmatprep.mubr.f32.mxu0 0.0
    %599 = vmatmul.mubr.f32.gmra.mrb[0].mxu0 %v481
    %v600 = vpop.f32.mrb[0].mxu0
    %v601 = vadd.f32 %v470, %v600
    %v602 = vpop.f32.mrb[0].mxu0
    %603 = vmatprep.mubr.f32.mxu0 0.0
    %604 = vmatmul.mubr.f32.gmra.mrb[0].mxu0 %v484
    %v605 = vpop.f32.mrb[0].mxu0
    %v606 = vadd.f32 %v470, %v605
    %v607 = vpop.f32.mrb[0].mxu0
    %608 = vmatprep.mubr.f32.mxu0 0.0
    %609 = vmatmul.mubr.f32.gmra.mrb[0].mxu0 %v487
    %v610 = vpop.f32.mrb[0].mxu0
    %v611 = vadd.f32 %v470, %v610
    %v612 = vpop.f32.mrb[0].mxu0
    %613 = vmatprep.mubr.f32.mxu0 0.0
    %614 = vmatmul.mubr.f32.gmra.mrb[0].mxu0 %v490
    %v615 = vpop.f32.mrb[0].mxu0
    %v616 = vadd.f32 %v470, %v615
    %v617 = vpop.f32.mrb[0].mxu0
    %618 = vmatprep.mubr.f32.mxu0 0.0
    %619 = vmatmul.mubr.f32.gmra.mrb[0].mxu0 %v493
    %v620 = vpop.f32.mrb[0].mxu0
    %v621 = vadd.f32 %v470, %v620
    %v622 = vpop.f32.mrb[0].mxu0
    %623 = vmatprep.mubr.f32.mxu0 0.0
    %624 = vmatmul.mubr.f32.gmra.mrb[0].mxu0 %v496
    %v625 = vpop.f32.mrb[0].mxu0
    %v626 = vadd.f32 %v470, %v625
    %v627 = vpop.f32.mrb[0].mxu0
    %628 = vmatprep.mubr.f32.mxu0 0.0
    %629 = vmatmul.mubr.f32.gmra.mrb[0].mxu0 %v499
    %v630 = vpop.f32.mrb[0].mxu0
    %v631 = vadd.f32 %v470, %v630
    %v632 = vpop.f32.mrb[0].mxu0
    %633 = vmatprep.mubr.f32.mxu0 0.0
    %634 = vmatmul.mubr.f32.gmra.mrb[0].mxu0 %v502
    %v635 = vpop.f32.mrb[0].mxu0
    %v636 = vadd.f32 %v470, %v635
    %v637 = vpop.f32.mrb[0].mxu0
    %638 = vmatprep.mubr.f32.mxu0 0.0
    %639 = vmatmul.mubr.f32.gmra.mrb[0].mxu0 %v505
    %v640 = vpop.f32.mrb[0].mxu0
    %v641 = vadd.f32 %v470, %v640
    %v642 = vpop.f32.mrb[0].mxu0
    %643 = vmatprep.mubr.f32.mxu0 0.0
    %644 = vmatmul.mubr.f32.gmra.mrb[0].mxu0 %v508
    %v645 = vpop.f32.mrb[0].mxu0
    %v646 = vadd.f32 %v470, %v645
    %v647 = vpop.f32.mrb[0].mxu0
    %648 = vmatprep.mubr.f32.mxu0 0.0
    %649 = vmatmul.mubr.f32.gmra.mrb[0].mxu0 %v511
    %v650 = vpop.f32.mrb[0].mxu0
    %v651 = vadd.f32 %v470, %v650
    %v652 = vpop.f32.mrb[0].mxu0
    %653 = vmatprep.mubr.f32.mxu0 0.0
    %654 = vmatmul.mubr.f32.gmra.mrb[0].mxu0 %v514
    %v655 = vpop.f32.mrb[0].mxu0
    %v656 = vadd.f32 %v470, %v655
    %v657 = vpop.f32.mrb[0].mxu0
    %658 = vmatprep.mubr.f32.mxu0 0.0
    %659 = vmatmul.mubr.f32.gmra.mrb[0].mxu0 %v517
    %v660 = vpop.f32.mrb[0].mxu0
    %v661 = vadd.f32 %v470, %v660
    %v662 = vpop.f32.mrb[0].mxu0
    %663 = vdwg.mxu0
    %vm664 = vcmask 23552
    %665 = vst.msk [vmem:[#allocation2] sm:$0xff] %vm664, %v586
    %666 = vst.msk [vmem:[#allocation2 + $0x8] sm:$0xff] %vm664, %v591
    %667 = vst.msk [vmem:[#allocation2 + $0x10] sm:$0xff] %vm664, %v596
    %668 = vst.msk [vmem:[#allocation2 + $0x18] sm:$0xff] %vm664, %v601
    %669 = vst.msk [vmem:[#allocation2 + $0x20] sm:$0xff] %vm664, %v606
    %670 = vst.msk [vmem:[#allocation2 + $0x28] sm:$0xff] %vm664, %v611
    %671 = vst.msk [vmem:[#allocation2 + $0x30] sm:$0xff] %vm664, %v616
    %672 = vst.msk [vmem:[#allocation2 + $0x38] sm:$0xff] %vm664, %v621
    %673 = vst.msk [vmem:[#allocation2 + $0x40] sm:$0xff] %vm664, %v626
    %674 = vst.msk [vmem:[#allocation2 + $0x48] sm:$0xff] %vm664, %v631
    %675 = vst.msk [vmem:[#allocation2 + $0x50] sm:$0xff] %vm664, %v636
    %676 = vst.msk [vmem:[#allocation2 + $0x58] sm:$0xff] %vm664, %v641
    %677 = vst.msk [vmem:[#allocation2 + $0x60] sm:$0xff] %vm664, %v646
    %678 = vst.msk [vmem:[#allocation2 + $0x68] sm:$0xff] %vm664, %v651
    %679 = vst.msk [vmem:[#allocation2 + $0x70] sm:$0xff] %vm664, %v656
    %680 = vst.msk [vmem:[#allocation2 + $0x78] sm:$0xff] %vm664, %v661
    // Predicated region
    $region10: #{tpu_custom_call.1} parent=1 // pred_check
      _
    $region11: #{tpu_custom_call.1} parent=1 // pred_check_branch
      %682 = sbr.rel (0) target = $region13
    $region12: #{tpu_custom_call.1} parent=1 // pred_region
      // Predicated region
      $region14: #{tpu_custom_call.1} parent=12 // pred_check
        _
      $region15: #{tpu_custom_call.1} parent=12 // pred_check_branch
        %684 = sbr.rel (0) target = $region17
      $region16: #{tpu_custom_call.1} parent=12 // pred_region
        // Predicated region
        $region18: #{tpu_custom_call.1} parent=16 // pred_check
          _
        $region19: #{tpu_custom_call.1} parent=16 // pred_check_branch
          %686 = sbr.rel (0) target = $region21
        $region20: #{tpu_custom_call.1} parent=16 // pred_region
          // Predicated region
          $region33: #{tpu_custom_call.1} parent=20 // pred_check
            _
          $region34: #{tpu_custom_call.1} parent=20 // pred_check_branch
            %701 = sbr.rel (0) target = $region36
          $region35: #{tpu_custom_call.1} parent=20 // pred_region
            loop: start=0, step=1, limit=1
            $region37: #{tpu_custom_call.1} parent=35 // loop_pre_header
              _
            $region38: #{tpu_custom_call.1} parent=35 // loop_header
              %s703 = sphi 0, %s707
              %p704 = scmp.ge.s32.totalorder %s703, 1
              %s708 = sphi [#allocation2], [#allocation2]
              %s709 = sphi %s2, %s2
            $region39: #{tpu_custom_call.1} parent=35 // loop_header_branch
              %706 = sbr.rel (%p704) target = $region43
            $region40: #{tpu_custom_call.1} parent=35 // loop_body
              %v710 = vld [vmem:[%s708] sm:$0xff]
              %711 = vst [vmem:[%s709] sm:$0xff] %v710
            $region41: #{tpu_custom_call.1} parent=35 // loop_footer
              %s707 = sadd.s32 1, %s703
            $region42: #{tpu_custom_call.1} parent=35 // loop_footer_branch
              %702 = sbr.rel target = $region38
            $region43: #{tpu_custom_call.1} parent=35 // loop_exit
              _
          $region36: #{tpu_custom_call.1} parent=20 // pred_fallthru
            _
          // Predicated region
          $region44: #{tpu_custom_call.1} parent=20 // pred_check
            _
          $region45: #{tpu_custom_call.1} parent=20 // pred_check_branch
            %713 = sbr.rel target = $region47
          $region46: #{tpu_custom_call.1} parent=20 // pred_region
            _
          $region47: #{tpu_custom_call.1} parent=20 // pred_fallthru
            _
        $region21: #{tpu_custom_call.1} parent=16 // pred_fallthru
          _
        // Predicated region
        $region22: #{tpu_custom_call.1} parent=16 // pred_check
          _
        $region23: #{tpu_custom_call.1} parent=16 // pred_check_branch
          %688 = sbr.rel target = $region25
        $region24: #{tpu_custom_call.1} parent=16 // pred_region
          loop: start=0, step=1, limit=1
          $region26: #{tpu_custom_call.1} parent=24 // loop_pre_header
            _
          $region27: #{tpu_custom_call.1} parent=24 // loop_header
            %s691 = sphi 0, %s695
            %p692 = scmp.ge.s32.totalorder %s691, 1
            %s696 = sphi [#allocation2], [#allocation2]
            %s697 = sphi %s2, %s2
          $region28: #{tpu_custom_call.1} parent=24 // loop_header_branch
            %694 = sbr.rel (%p692) target = $region32
          $region29: #{tpu_custom_call.1} parent=24 // loop_body
            %v698 = vld [vmem:[%s696] sm:$0xff]
            %699 = vst [vmem:[%s697] sm:$0xff] %v698
          $region30: #{tpu_custom_call.1} parent=24 // loop_footer
            %s695 = sadd.s32 1, %s691
          $region31: #{tpu_custom_call.1} parent=24 // loop_footer_branch
            %690 = sbr.rel target = $region27
          $region32: #{tpu_custom_call.1} parent=24 // loop_exit
            _
        $region25: #{tpu_custom_call.1} parent=16 // pred_fallthru
          _
      $region17: #{tpu_custom_call.1} parent=12 // pred_fallthru
        _
      %714 = vnop
    $region13: #{tpu_custom_call.1} parent=1 // pred_fallthru
      _
    // Predicated region
    $region48: #{tpu_custom_call.1} parent=1 // pred_check
      _
    $region49: #{tpu_custom_call.1} parent=1 // pred_check_branch
      %716 = sbr.rel (0) target = $region51
    $region50: #{tpu_custom_call.1} parent=1 // pred_region
      _
    $region51: #{tpu_custom_call.1} parent=1 // pred_fallthru
      _

</llo_original>
